<compile_context>
chip_gen: v6e
topology: v6e:2x2x1
jax: 0.10.0
libtpu: 0.0.40
codegen_flags: <defaults>
</compile_context>

<pallas_src>
import functools

import jax
import jax.numpy as jnp
from jax.experimental import pallas as pl
from jax.experimental.pallas import tpu as pltpu


PAD = 128  # lane-dense padded width for every feature/hidden/output dim


# ---------------------------------------------------------------------------
# Fused Pallas kernel: all conv layers + MLP head + softmax in one body
# ---------------------------------------------------------------------------

def _gcn_fused_kernel(a_ref, x_ref, w_ref, b_ref, o_ref,
                      *, num_conv_layers, output_size):
    L = num_conv_layers
    a = a_ref[...].astype(jnp.bfloat16)   # (N, N) normalized adjacency, VMEM-resident
    h = x_ref[...]                         # (N, PAD) node features, f32 activations

    # GCNConv layers: ReLU(A_hat @ (H @ W_l) + b_l)   (static unroll over L)
    for l in range(L):
        hw = jnp.dot(h.astype(jnp.bfloat16), w_ref[l],
                     preferred_element_type=jnp.float32)
        agg = jnp.dot(a, hw.astype(jnp.bfloat16),
                      preferred_element_type=jnp.float32)
        h = jnp.maximum(agg + b_ref[l], 0.0)

    # lin1 + ReLU
    h = jnp.maximum(
        jnp.dot(h.astype(jnp.bfloat16), w_ref[L],
                preferred_element_type=jnp.float32) + b_ref[L], 0.0)
    # lin2 + ReLU
    h = jnp.maximum(
        jnp.dot(h.astype(jnp.bfloat16), w_ref[L + 1],
                preferred_element_type=jnp.float32) + b_ref[L + 1], 0.0)

    # output linear + row-wise softmax over the first `output_size` lanes only
    y = jnp.dot(h.astype(jnp.bfloat16), w_ref[L + 2],
                preferred_element_type=jnp.float32) + b_ref[L + 2]
    lane = jax.lax.broadcasted_iota(jnp.int32, y.shape, 1)
    valid = lane < output_size
    y = jnp.where(valid, y, -1e30)
    m = jnp.max(y, axis=-1, keepdims=True)
    e = jnp.where(valid, jnp.exp(y - m), 0.0)
    denom = jnp.sum(e, axis=-1, keepdims=True)
    # Exact division (not approx reciprocal): rows sum to 1 to f32 rounding.
    o_ref[...] = e / denom


def gcn_fused_forward(a_hat, x, params, *, num_conv_layers, output_size):
    n, f = x.shape
    L = num_conv_layers
    w_stack = params["w"]   # (L+3, PAD, PAD) bf16
    b_stack = params["b"]   # (L+3, 1, PAD)   f32

    # Lane-pad the node features to PAD columns (zeros are inert downstream).
    x_pad = jnp.zeros((n, PAD), jnp.float32).at[:, :f].set(x)

    vspec = pl.BlockSpec(memory_space=pltpu.MemorySpace.VMEM)
    kernel = functools.partial(_gcn_fused_kernel,
                               num_conv_layers=L,
                               output_size=output_size)

    flops = 2 * n * PAD * PAD * (L + 3) + 2 * n * n * PAD * L
    bytes_accessed = (a_hat.size * a_hat.dtype.itemsize
                      + n * PAD * 4                       # x_pad in
                      + w_stack.size * w_stack.dtype.itemsize
                      + b_stack.size * 4
                      + n * PAD * 4)                      # output
    cost = pl.CostEstimate(flops=int(flops),
                           transcendentals=int(n * PAD),
                           bytes_accessed=int(bytes_accessed))

    out = pl.pallas_call(
        kernel,
        out_shape=jax.ShapeDtypeStruct((n, PAD), jnp.float32),
        in_specs=[vspec] * 4,
        out_specs=vspec,
        cost_estimate=cost,
    )(a_hat, x_pad, w_stack, b_stack)

    # Lane-padded (N, 128) slab: valid probabilities live in [:, :output_size],
    # padded lanes are exactly 0.  No wrapper-side narrow slice (perf review).
    return out


gcn_forward = jax.jit(gcn_fused_forward,
                      static_argnames=("num_conv_layers", "output_size"))


# ---------------------------------------------------------------------------
# Plain-JAX glue: normalized adjacency (static graph precompute) and params
# ---------------------------------------------------------------------------

def normalized_adjacency(edge_index, num_nodes):
    """A_hat = D^-1/2 (A + I) D^-1/2 (PyG GCNConv default normalization)."""
    src, dst = edge_index[0], edge_index[1]
    a = jnp.zeros((num_nodes, num_nodes), jnp.float32)
    a = a.at[dst, src].add(1.0)                    # messages flow src -> dst
    a = a + jnp.eye(num_nodes, dtype=jnp.float32)  # add self loops
    deg = jnp.sum(a, axis=1)
    d_inv_sqrt = jnp.where(deg > 0, 1.0 / jnp.sqrt(deg), 0.0)
    return a * d_inv_sqrt[:, None] * d_inv_sqrt[None, :]


def glorot(key, shape):
    fan_in, fan_out = shape
    limit = jnp.sqrt(6.0 / (fan_in + fan_out))
    return jax.random.uniform(key, shape, jnp.float32, -limit, limit)


def init_params(key, hp):
    """Stacked, 128-lane zero-padded weight/bias slabs (L+3 layers total).

    Slab order: conv_0 .. conv_{L-1}, lin1, lin2, output.
    Weights stored transposed ([in, out]) in bf16; biases in f32.
    (Init: glorot weights / zero conv bias / uniform linear bias — numerical
    parity with torch's default Kaiming init is not attempted.)
    """
    L = hp["num_conv_layers"]
    n_slabs = L + 3
    keys = jax.random.split(key, n_slabs)

    dims = []
    in_dim = hp["num_node_features"]
    for _ in range(L):
        dims.append((in_dim, hp["conv_size"]))
        in_dim = hp["conv_size"]
    dims += [(hp["conv_size"], hp["lin1_size"]),
             (hp["lin1_size"], hp["lin2_size"]),
             (hp["lin2_size"], hp["output_size"])]

    w = jnp.zeros((n_slabs, PAD, PAD), jnp.float32)
    b = jnp.zeros((n_slabs, 1, PAD), jnp.float32)
    for i, (din, dout) in enumerate(dims):
        wk, bk = jax.random.split(keys[i])
        w = w.at[i, :din, :dout].set(glorot(wk, (din, dout)))
        if i >= L:  # Linear layers: torch-style uniform bias; GCNConv bias = 0
            bound = 1.0 / jnp.sqrt(jnp.float32(din))
            b = b.at[i, 0, :dout].set(
                jax.random.uniform(bk, (dout,), jnp.float32, -bound, bound))

    return {"w": w.astype(jnp.bfloat16), "b": b}


# ---------------------------------------------------------------------------
# Main
# ---------------------------------------------------------------------------

if __name__ == "__main__":
    hparams = {
        "num_node_features": 8,
        "num_conv_layers": 2,
        "conv_size": 32,
        "lin1_size": 32,
        "lin2_size": 32,
        "output_size": 8,
        "activation": "relu",
        "pool_method": "mean",   # constructed but unused by forward()
    }

    num_nodes = 16
    key = jax.random.PRNGKey(0)
    k_x, k_p = jax.random.split(key)

    # Node features and a deterministic bidirectional ring graph.
    x = jax.random.normal(k_x, (num_nodes, hparams["num_node_features"]),
                          jnp.float32)
    src = jnp.arange(num_nodes, dtype=jnp.int32)
    dst = (src + 1) % num_nodes
    edge_index = jnp.stack(
        [jnp.concatenate([src, dst]), jnp.concatenate([dst, src])], axis=0)
    # `batch` vector exists in the Data object but is unused in forward().

    params = init_params(k_p, hparams)

    # Precompute the normalized adjacency once (static graph).
    a_hat = jax.block_until_ready(normalized_adjacency(edge_index, num_nodes))

    out_pad = gcn_forward(a_hat, x, params,
                          num_conv_layers=hparams["num_conv_layers"],
                          output_size=hparams["output_size"])
    out_pad = jax.block_until_ready(out_pad)

    assert out_pad.shape == (num_nodes, PAD)
    probs = out_pad[:, :hparams["output_size"]]            # host-side check only
    pad_lanes = out_pad[:, hparams["output_size"]:]
    assert probs.shape == (num_nodes, hparams["output_size"])
    # Exact-division softmax: rows sum to 1 within f32 rounding.
    assert jnp.allclose(jnp.sum(probs, axis=1), 1.0, atol=1e-4)
    # Padded lanes are masked to exactly zero.
    assert jnp.all(pad_lanes == 0.0)
    assert jnp.all(probs >= 0.0)

    print("KERNEL_OK")
</pallas_src>

<mosaic_0001>
module attributes {stable_mosaic.version = 11 : i64} {
  func.func @_gcn_fused_kernel(%arg0: memref<16x16xf32, #tpu.memory_space<vmem>>, %arg1: memref<16x128xf32, #tpu.memory_space<vmem>>, %arg2: memref<5x128x128xbf16, #tpu.memory_space<vmem>>, %arg3: memref<5x1x128xf32, #tpu.memory_space<vmem>>, %arg4: memref<16x128xf32, #tpu.memory_space<vmem>>) attributes {dimension_semantics = [], scalar_prefetch = 0 : i64, scratch_operands = 0 : i64, tpu.core_type = #tpu.core_type<tc>} {
    %c0 = arith.constant 0 : index
    %c0_0 = arith.constant 0 : index
    %0 = vector.load %arg0[%c0, %c0_0] : memref<16x16xf32, #tpu.memory_space<vmem>>, vector<16x16xf32>
    %1 = arith.truncf %0 : vector<16x16xf32> to vector<16x16xbf16>
    %c0_1 = arith.constant 0 : index
    %c0_2 = arith.constant 0 : index
    %2 = vector.load %arg1[%c0_1, %c0_2] : memref<16x128xf32, #tpu.memory_space<vmem>>, vector<16x128xf32>
    %3 = arith.truncf %2 : vector<16x128xf32> to vector<16x128xbf16>
    %c0_3 = arith.constant 0 : index
    %c0_4 = arith.constant 0 : index
    %c0_5 = arith.constant 0 : index
    %4 = vector.load %arg2[%c0_3, %c0_4, %c0_5] : memref<5x128x128xbf16, #tpu.memory_space<vmem>>, vector<1x128x128xbf16>
    %5 = vector.shape_cast %4 : vector<1x128x128xbf16> to vector<128x128xbf16>
    %cst = arith.constant dense<0.000000e+00> : vector<16x128xf32>
    %6 = tpu.matmul %3, %5, %cst {dimension_numbers = #tpu.dot_dimension_numbers<[1], [0], [0], [1], [0, 0, 1, 1], [], []>} : vector<16x128xbf16>, vector<128x128xbf16>, vector<16x128xf32> -> vector<16x128xf32>
    %7 = arith.truncf %6 : vector<16x128xf32> to vector<16x128xbf16>
    %cst_6 = arith.constant dense<0.000000e+00> : vector<16x128xf32>
    %8 = tpu.matmul %1, %7, %cst_6 {dimension_numbers = #tpu.dot_dimension_numbers<[1], [0], [0], [1], [0, 0, 1, 1], [], []>} : vector<16x16xbf16>, vector<16x128xbf16>, vector<16x128xf32> -> vector<16x128xf32>
    %c0_7 = arith.constant 0 : index
    %c0_8 = arith.constant 0 : index
    %c0_9 = arith.constant 0 : index
    %9 = vector.load %arg3[%c0_7, %c0_8, %c0_9] : memref<5x1x128xf32, #tpu.memory_space<vmem>>, vector<1x1x128xf32>
    %10 = vector.shape_cast %9 : vector<1x1x128xf32> to vector<1x128xf32>
    %11 = vector.broadcast %10 : vector<1x128xf32> to vector<16x128xf32>
    %12 = arith.addf %8, %11 : vector<16x128xf32>
    %cst_10 = arith.constant 0.000000e+00 : f32
    %13 = vector.broadcast %cst_10 : f32 to vector<16x128xf32>
    %14 = arith.maximumf %12, %13 : vector<16x128xf32>
    %15 = arith.truncf %14 : vector<16x128xf32> to vector<16x128xbf16>
    %c1 = arith.constant 1 : index
    %c0_11 = arith.constant 0 : index
    %c0_12 = arith.constant 0 : index
    %16 = vector.load %arg2[%c1, %c0_11, %c0_12] : memref<5x128x128xbf16, #tpu.memory_space<vmem>>, vector<1x128x128xbf16>
    %17 = vector.shape_cast %16 : vector<1x128x128xbf16> to vector<128x128xbf16>
    %cst_13 = arith.constant dense<0.000000e+00> : vector<16x128xf32>
    %18 = tpu.matmul %15, %17, %cst_13 {dimension_numbers = #tpu.dot_dimension_numbers<[1], [0], [0], [1], [0, 0, 1, 1], [], []>} : vector<16x128xbf16>, vector<128x128xbf16>, vector<16x128xf32> -> vector<16x128xf32>
    %19 = arith.truncf %18 : vector<16x128xf32> to vector<16x128xbf16>
    %cst_14 = arith.constant dense<0.000000e+00> : vector<16x128xf32>
    %20 = tpu.matmul %1, %19, %cst_14 {dimension_numbers = #tpu.dot_dimension_numbers<[1], [0], [0], [1], [0, 0, 1, 1], [], []>} : vector<16x16xbf16>, vector<16x128xbf16>, vector<16x128xf32> -> vector<16x128xf32>
    %c1_15 = arith.constant 1 : index
    %c0_16 = arith.constant 0 : index
    %c0_17 = arith.constant 0 : index
    %21 = vector.load %arg3[%c1_15, %c0_16, %c0_17] : memref<5x1x128xf32, #tpu.memory_space<vmem>>, vector<1x1x128xf32>
    %22 = vector.shape_cast %21 : vector<1x1x128xf32> to vector<1x128xf32>
    %23 = vector.broadcast %22 : vector<1x128xf32> to vector<16x128xf32>
    %24 = arith.addf %20, %23 : vector<16x128xf32>
    %cst_18 = arith.constant 0.000000e+00 : f32
    %25 = vector.broadcast %cst_18 : f32 to vector<16x128xf32>
    %26 = arith.maximumf %24, %25 : vector<16x128xf32>
    %27 = arith.truncf %26 : vector<16x128xf32> to vector<16x128xbf16>
    %c2 = arith.constant 2 : index
    %c0_19 = arith.constant 0 : index
    %c0_20 = arith.constant 0 : index
    %28 = vector.load %arg2[%c2, %c0_19, %c0_20] : memref<5x128x128xbf16, #tpu.memory_space<vmem>>, vector<1x128x128xbf16>
    %29 = vector.shape_cast %28 : vector<1x128x128xbf16> to vector<128x128xbf16>
    %cst_21 = arith.constant dense<0.000000e+00> : vector<16x128xf32>
    %30 = tpu.matmul %27, %29, %cst_21 {dimension_numbers = #tpu.dot_dimension_numbers<[1], [0], [0], [1], [0, 0, 1, 1], [], []>} : vector<16x128xbf16>, vector<128x128xbf16>, vector<16x128xf32> -> vector<16x128xf32>
    %c2_22 = arith.constant 2 : index
    %c0_23 = arith.constant 0 : index
    %c0_24 = arith.constant 0 : index
    %31 = vector.load %arg3[%c2_22, %c0_23, %c0_24] : memref<5x1x128xf32, #tpu.memory_space<vmem>>, vector<1x1x128xf32>
    %32 = vector.shape_cast %31 : vector<1x1x128xf32> to vector<1x128xf32>
    %33 = vector.broadcast %32 : vector<1x128xf32> to vector<16x128xf32>
    %34 = arith.addf %30, %33 : vector<16x128xf32>
    %cst_25 = arith.constant 0.000000e+00 : f32
    %35 = vector.broadcast %cst_25 : f32 to vector<16x128xf32>
    %36 = arith.maximumf %34, %35 : vector<16x128xf32>
    %37 = arith.truncf %36 : vector<16x128xf32> to vector<16x128xbf16>
    %c3 = arith.constant 3 : index
    %c0_26 = arith.constant 0 : index
    %c0_27 = arith.constant 0 : index
    %38 = vector.load %arg2[%c3, %c0_26, %c0_27] : memref<5x128x128xbf16, #tpu.memory_space<vmem>>, vector<1x128x128xbf16>
    %39 = vector.shape_cast %38 : vector<1x128x128xbf16> to vector<128x128xbf16>
    %cst_28 = arith.constant dense<0.000000e+00> : vector<16x128xf32>
    %40 = tpu.matmul %37, %39, %cst_28 {dimension_numbers = #tpu.dot_dimension_numbers<[1], [0], [0], [1], [0, 0, 1, 1], [], []>} : vector<16x128xbf16>, vector<128x128xbf16>, vector<16x128xf32> -> vector<16x128xf32>
    %c3_29 = arith.constant 3 : index
    %c0_30 = arith.constant 0 : index
    %c0_31 = arith.constant 0 : index
    %41 = vector.load %arg3[%c3_29, %c0_30, %c0_31] : memref<5x1x128xf32, #tpu.memory_space<vmem>>, vector<1x1x128xf32>
    %42 = vector.shape_cast %41 : vector<1x1x128xf32> to vector<1x128xf32>
    %43 = vector.broadcast %42 : vector<1x128xf32> to vector<16x128xf32>
    %44 = arith.addf %40, %43 : vector<16x128xf32>
    %cst_32 = arith.constant 0.000000e+00 : f32
    %45 = vector.broadcast %cst_32 : f32 to vector<16x128xf32>
    %46 = arith.maximumf %44, %45 : vector<16x128xf32>
    %47 = arith.truncf %46 : vector<16x128xf32> to vector<16x128xbf16>
    %c4 = arith.constant 4 : index
    %c0_33 = arith.constant 0 : index
    %c0_34 = arith.constant 0 : index
    %48 = vector.load %arg2[%c4, %c0_33, %c0_34] : memref<5x128x128xbf16, #tpu.memory_space<vmem>>, vector<1x128x128xbf16>
    %49 = vector.shape_cast %48 : vector<1x128x128xbf16> to vector<128x128xbf16>
    %cst_35 = arith.constant dense<0.000000e+00> : vector<16x128xf32>
    %50 = tpu.matmul %47, %49, %cst_35 {dimension_numbers = #tpu.dot_dimension_numbers<[1], [0], [0], [1], [0, 0, 1, 1], [], []>} : vector<16x128xbf16>, vector<128x128xbf16>, vector<16x128xf32> -> vector<16x128xf32>
    %c4_36 = arith.constant 4 : index
    %c0_37 = arith.constant 0 : index
    %c0_38 = arith.constant 0 : index
    %51 = vector.load %arg3[%c4_36, %c0_37, %c0_38] : memref<5x1x128xf32, #tpu.memory_space<vmem>>, vector<1x1x128xf32>
    %52 = vector.shape_cast %51 : vector<1x1x128xf32> to vector<1x128xf32>
    %53 = vector.broadcast %52 : vector<1x128xf32> to vector<16x128xf32>
    %54 = arith.addf %50, %53 : vector<16x128xf32>
    %55 = tpu.iota {dimensions = array<i32: 1>} : vector<16x128xi32>
    %c8_i32 = arith.constant 8 : i32
    %56 = vector.broadcast %c8_i32 : i32 to vector<16x128xi32>
    %57 = arith.cmpi slt, %55, %56 : vector<16x128xi32>
    %cst_39 = arith.constant -1.000000e+30 : f32
    %58 = vector.broadcast %cst_39 : f32 to vector<16x128xf32>
    %59 = arith.select %57, %54, %58 : vector<16x128xi1>, vector<16x128xf32>
    %cst_40 = arith.constant dense<0xFF800000> : vector<16xf32>
    %60 = vector.multi_reduction <maximumf>, %59, %cst_40 [1] : vector<16x128xf32> to vector<16xf32>
    %61 = vector.shape_cast %60 : vector<16xf32> to vector<16x1xf32>
    %62 = vector.broadcast %61 : vector<16x1xf32> to vector<16x128xf32>
    %63 = arith.subf %59, %62 : vector<16x128xf32>
    %64 = math.exp %63 : vector<16x128xf32>
    %cst_41 = arith.constant 0.000000e+00 : f32
    %65 = vector.broadcast %cst_41 : f32 to vector<16x128xf32>
    %66 = arith.select %57, %64, %65 : vector<16x128xi1>, vector<16x128xf32>
    %cst_42 = arith.constant dense<0.000000e+00> : vector<16xf32>
    %67 = vector.multi_reduction <add>, %66, %cst_42 [1] : vector<16x128xf32> to vector<16xf32>
    %68 = vector.shape_cast %67 : vector<16xf32> to vector<16x1xf32>
    %69 = vector.broadcast %68 : vector<16x1xf32> to vector<16x128xf32>
    %70 = arith.divf %66, %69 : vector<16x128xf32>
    %c0_43 = arith.constant 0 : index
    %c0_44 = arith.constant 0 : index
    %71 = vector.load %arg4[%c0_43, %c0_44] : memref<16x128xf32, #tpu.memory_space<vmem>>, vector<16x128xf32>
    tpu.vector_store %arg4[%c0_43, %c0_44], %70 {strides = array<i32>} : memref<16x128xf32, #tpu.memory_space<vmem>>, vector<16x128xf32>,
    return
  }
}

</mosaic_0001>

<llo_original>
// kernel: gcn_fused_forward.1
$region0: #{gcn_fused_forward.1}
  #allocation0 [shape = 'u32[]', space=smem, size = 0x4, offset = 0x4, fixed_abs, tag = 'smem constant byte address 0x4 - core index']
  #allocation1 [shape = 'u32[144,128]{1,0:T(1,128)}', space=vmem, size = 0x12000, scoped, tag = 'internal scratch']
  %s0 = inlined_call_operand.vmem [shape: f32[16,16], index: 0, kind: input, shape index: {}]
  %s1 = inlined_call_operand.vmem [shape: f32[16,128], index: 1, kind: input, shape index: {}]
  %s2 = inlined_call_operand.hbm [shape: bf16[5,128,128], index: 2, kind: input, shape index: {}]
  %s3 = inlined_call_operand.vmem [shape: f32[5,1,128], index: 3, kind: input, shape index: {}]
  %s4 = inlined_call_operand.hbm [shape: f32[16,128], index: 4, kind: output, shape index: {}]
  %s5 = sld [smem:[#allocation0]]
  $region30: #{gcn_fused_forward.1} parent=0
    _
  %s7 = ssub.s32 1, %s5
  %s8 = scalar_select 0, %s7, %s5
  $region1: #{gcn_fused_forward.1} parent=0
    #allocation2 [shape = 'u8[163840]{0}', space=vmem, size = 0x28000, scoped, tag = 'input window, operand 2, single buffered']
    #allocation3 [shape = 's32[1]{0}', space=sflag, size = 0x4, scoped, tag = 'scoped memory for gcn_fused_forward.1']
    #allocation4 [shape = 's32[1]{0}', space=sflag, size = 0x4, scoped, tag = 'scoped memory for gcn_fused_forward.1']
    #allocation5 [shape = 'u8[8192]{0}', space=vmem, size = 0x2000, scoped, tag = 'output window, operand 0, single buffered']
    %9 = vsyncpa [#allocation3], 0
    %10 = vsyncpa [#allocation4], 0
    // Predicated region
    $region2: #{gcn_fused_forward.1} parent=1 // pred_check
      _
    $region3: #{gcn_fused_forward.1} parent=1 // pred_check_branch
      %12 = sbr.rel (0) target = $region5
    $region4: #{gcn_fused_forward.1} parent=1 // pred_region
      _
    $region5: #{gcn_fused_forward.1} parent=1 // pred_fallthru
      _
    // Predicated region
    $region6: #{gcn_fused_forward.1} parent=1 // pred_check
      _
    $region7: #{gcn_fused_forward.1} parent=1 // pred_check_branch
      %14 = sbr.rel (0) target = $region9
    $region8: #{gcn_fused_forward.1} parent=1 // pred_region
      _
    $region9: #{gcn_fused_forward.1} parent=1 // pred_fallthru
      _
    // Predicated region
    $region10: #{gcn_fused_forward.1} parent=1 // pred_check
      _
    $region11: #{gcn_fused_forward.1} parent=1 // pred_check_branch
      %16 = sbr.rel (0) target = $region13
    $region12: #{gcn_fused_forward.1} parent=1 // pred_region
      %s18 = ssub.s32 5120, 5120
      %19 = vsyncadd [#allocation3], %s18
      %s20 = sshll.u32 [#allocation2], 4
      %s21 = int_to_ptr.vmem [resolvable:$true] %s20
      %26 = dma.hbm_to_vmem [thread:$0]  %s2, 5120, %s21, [#allocation3], 64, 64, 4
    $region13: #{gcn_fused_forward.1} parent=1 // pred_fallthru
      _
    // Predicated region
    $region14: #{gcn_fused_forward.1} parent=1 // pred_check
      _
    $region15: #{gcn_fused_forward.1} parent=1 // pred_check_branch
      %28 = sbr.rel (0) target = $region17
    $region16: #{gcn_fused_forward.1} parent=1 // pred_region
      _
    $region17: #{gcn_fused_forward.1} parent=1 // pred_fallthru
      _
    // Predicated region
    $region18: #{gcn_fused_forward.1} parent=1 // pred_check
      _
    $region19: #{gcn_fused_forward.1} parent=1 // pred_check_branch
      %30 = sbr.rel (0) target = $region21
    $region20: #{gcn_fused_forward.1} parent=1 // pred_region
      %31 = dma.done [#allocation3], 5120
    $region21: #{gcn_fused_forward.1} parent=1 // pred_fallthru
      _
    %v33 = vld [vmem:[%s0] sm:$0xff]
    %v34 = vld [vmem:[%s0 + $0x8] sm:$0xff]
    %v35 = vpack.c.bf16 %v34, %v33
    %v36 = vld [vmem:[%s1] sm:$0xff]
    %v37 = vld [vmem:[%s1 + $0x8] sm:$0xff]
    %v38 = vpack.c.bf16 %v37, %v36
    %v39 = vld [vmem:[#allocation2] sm:$0xf]
    %v40 = vld [vmem:[#allocation2 + $0x4] sm:$0xf]
    %v41 = vld [vmem:[#allocation2 + $0x8] sm:$0xf]
    %v42 = vld [vmem:[#allocation2 + $0xc] sm:$0xf]
    %v43 = vld [vmem:[#allocation2 + $0x10] sm:$0xf]
    %v44 = vld [vmem:[#allocation2 + $0x14] sm:$0xf]
    %v45 = vld [vmem:[#allocation2 + $0x18] sm:$0xf]
    %v46 = vld [vmem:[#allocation2 + $0x1c] sm:$0xf]
    %v47 = vld [vmem:[#allocation2 + $0x20] sm:$0xf]
    %v48 = vld [vmem:[#allocation2 + $0x24] sm:$0xf]
    %v49 = vld [vmem:[#allocation2 + $0x28] sm:$0xf]
    %v50 = vld [vmem:[#allocation2 + $0x2c] sm:$0xf]
    %v51 = vld [vmem:[#allocation2 + $0x30] sm:$0xf]
    %v52 = vld [vmem:[#allocation2 + $0x34] sm:$0xf]
    %v53 = vld [vmem:[#allocation2 + $0x38] sm:$0xf]
    %v54 = vld [vmem:[#allocation2 + $0x3c] sm:$0xf]
    %v71 = vunpack.c.l.b16 %v39
    %v72 = vunpack.c.l.b16 %v40
    %v73 = vunpack.c.l.b16 %v41
    %v74 = vunpack.c.l.b16 %v42
    %v75 = vunpack.c.l.b16 %v43
    %v76 = vunpack.c.l.b16 %v44
    %v77 = vunpack.c.l.b16 %v45
    %v78 = vunpack.c.l.b16 %v46
    %v79 = vunpack.c.l.b16 %v47
    %v80 = vunpack.c.l.b16 %v48
    %v81 = vunpack.c.l.b16 %v49
    %v82 = vunpack.c.l.b16 %v50
    %v83 = vunpack.c.l.b16 %v51
    %v84 = vunpack.c.l.b16 %v52
    %v85 = vunpack.c.l.b16 %v53
    %v86 = vunpack.c.l.b16 %v54
    %v87 = vpack.c.b16 %v72, %v71
    %v88 = vpack.c.b16 %v74, %v73
    %v89 = vpack.c.b16 %v76, %v75
    %v90 = vpack.c.b16 %v78, %v77
    %v91 = vpack.c.b16 %v80, %v79
    %v92 = vpack.c.b16 %v82, %v81
    %v93 = vpack.c.b16 %v84, %v83
    %v94 = vpack.c.b16 %v86, %v85
    %103 = vmatprep.subr.bf16.mxu0 0
    %104 = vmatpush1.bf16.msra.mxu0 %v94
    %105 = vmatprep.subr.bf16.mxu0 0
    %106 = vmatpush1.bf16.msra.mxu0 %v93
    %107 = vmatprep.subr.bf16.mxu0 0
    %108 = vmatpush1.bf16.msra.mxu0 %v92
    %109 = vmatprep.subr.bf16.mxu0 0
    %110 = vmatpush1.bf16.msra.mxu0 %v91
    %111 = vmatprep.subr.bf16.mxu0 0
    %112 = vmatpush1.bf16.msra.mxu0 %v90
    %113 = vmatprep.subr.bf16.mxu0 0
    %114 = vmatpush1.bf16.msra.mxu0 %v89
    %115 = vmatprep.subr.bf16.mxu0 0
    %116 = vmatpush1.bf16.msra.mxu0 %v88
    %117 = vmatprep.subr.bf16.mxu0 0
    %118 = vmatpush1.bf16.msra.mxu0 %v87
    %119 = vmatprep.subr.bf16.mxu0 0
    %120 = vmatpush2.bf16.msra.mxu0 0
    %121 = vmatprep.subr.bf16.mxu0 0
    %122 = vmatpush2.bf16.msra.mxu0 0
    %123 = vmatprep.subr.bf16.mxu0 0
    %124 = vmatpush2.bf16.msra.mxu0 0
    %125 = vmatprep.subr.bf16.mxu0 0
    %126 = vmatpush2.bf16.msra.mxu0 0
    %127 = vmatprep.subr.bf16.mxu0 0
    %128 = vmatpush2.bf16.msra.mxu0 0
    %129 = vmatprep.subr.bf16.mxu0 0
    %130 = vmatpush2.bf16.msra.mxu0 0
    %131 = vmatprep.subr.bf16.mxu0 0
    %132 = vmatpush2.bf16.msra.mxu0 0
    %133 = vmatprep.subr.bf16.mxu0 0
    %134 = vmatpush2.bf16.msra.mxu0 0
    %135 = vmatprep.mubr.bf16.mxu0 0
    %136 = vmatmul.mubr.bf16.gmra.mxu0 %v38
    %v137 = vpop.f32.mrf.mxu0
    %v138 = vadd.f32 0.0, %v137
    %v139 = vpop.f32.mrf.mxu0
    %v140 = vpop.f32.mrf.mxu0
    %v141 = vadd.f32 0.0, %v140
    %v142 = vpop.f32.mrf.mxu0
    %143 = vdwg.mxu0
    %v144 = vpack.c.bf16 %v141, %v138
    %v145 = vld [vmem:[%s3] sm:$0x1]
    %v147 = vlaneseq
    %v148 = vshrl.u32 %v147, 7
    %v149 = vsub.s32 0, %v148
    %v150 = vrot.slane %v145, %v149
    %vm152 = vcmask 130048
    %v154 = vsel %vm152, %v35, 0
    %156 = vmatprep.subr.bf16.mxu0 0
    %157 = vmatpush1.bf16.msra.mxu0 0
    %158 = vmatprep.subr.bf16.mxu0 0
    %159 = vmatpush1.bf16.msra.mxu0 0
    %160 = vmatprep.subr.bf16.mxu0 0
    %161 = vmatpush1.bf16.msra.mxu0 0
    %162 = vmatprep.subr.bf16.mxu0 0
    %163 = vmatpush1.bf16.msra.mxu0 0
    %164 = vmatprep.subr.bf16.mxu0 0
    %165 = vmatpush1.bf16.msra.mxu0 0
    %166 = vmatprep.subr.bf16.mxu0 0
    %167 = vmatpush1.bf16.msra.mxu0 0
    %168 = vmatprep.subr.bf16.mxu0 0
    %169 = vmatpush1.bf16.msra.mxu0 0
    %170 = vmatprep.subr.bf16.mxu0 0
    %171 = vmatpush1.bf16.msra.mxu0 %v144
    %172 = vmatprep.subr.bf16.mxu0 0
    %173 = vmatpush2.bf16.msra.mxu0 0
    %174 = vmatprep.subr.bf16.mxu0 0
    %175 = vmatpush2.bf16.msra.mxu0 0
    %176 = vmatprep.subr.bf16.mxu0 0
    %177 = vmatpush2.bf16.msra.mxu0 0
    %178 = vmatprep.subr.bf16.mxu0 0
    %179 = vmatpush2.bf16.msra.mxu0 0
    %180 = vmatprep.subr.bf16.mxu0 0
    %181 = vmatpush2.bf16.msra.mxu0 0
    %182 = vmatprep.subr.bf16.mxu0 0
    %183 = vmatpush2.bf16.msra.mxu0 0
    %184 = vmatprep.subr.bf16.mxu0 0
    %185 = vmatpush2.bf16.msra.mxu0 0
    %186 = vmatprep.subr.bf16.mxu0 0
    %187 = vmatpush2.bf16.msra.mxu0 0
    %188 = vmatprep.mubr.bf16.mxu0 0
    %189 = vmatmul.mubr.bf16.gmra.mxu0 %v154
    %v190 = vpop.f32.mrf.mxu0
    %v191 = vadd.f32 %v150, %v190
    %v192 = vpop.f32.mrf.mxu0
    %v193 = vpop.f32.mrf.mxu0
    %v194 = vadd.f32 %v150, %v193
    %v195 = vpop.f32.mrf.mxu0
    %196 = vdwg.mxu0
    %v197 = vmax.f32 %v191, 0.0
    %v198 = vmax.f32 %v194, 0.0
    %v199 = vpack.c.bf16 %v198, %v197
    %s200 = scalar_lea.vmem [#allocation2], 64
    %v201 = vld [vmem:[%s200] sm:$0xf]
    %v202 = vld [vmem:[%s200 + $0x4] sm:$0xf]
    %v203 = vld [vmem:[%s200 + $0x8] sm:$0xf]
    %v204 = vld [vmem:[%s200 + $0xc] sm:$0xf]
    %v205 = vld [vmem:[%s200 + $0x10] sm:$0xf]
    %v206 = vld [vmem:[%s200 + $0x14] sm:$0xf]
    %v207 = vld [vmem:[%s200 + $0x18] sm:$0xf]
    %v208 = vld [vmem:[%s200 + $0x1c] sm:$0xf]
    %v209 = vld [vmem:[%s200 + $0x20] sm:$0xf]
    %v210 = vld [vmem:[%s200 + $0x24] sm:$0xf]
    %v211 = vld [vmem:[%s200 + $0x28] sm:$0xf]
    %v212 = vld [vmem:[%s200 + $0x2c] sm:$0xf]
    %v213 = vld [vmem:[%s200 + $0x30] sm:$0xf]
    %v214 = vld [vmem:[%s200 + $0x34] sm:$0xf]
    %v215 = vld [vmem:[%s200 + $0x38] sm:$0xf]
    %v216 = vld [vmem:[%s200 + $0x3c] sm:$0xf]
    %v233 = vunpack.c.l.b16 %v201
    %v234 = vunpack.c.l.b16 %v202
    %v235 = vunpack.c.l.b16 %v203
    %v236 = vunpack.c.l.b16 %v204
    %v237 = vunpack.c.l.b16 %v205
    %v238 = vunpack.c.l.b16 %v206
    %v239 = vunpack.c.l.b16 %v207
    %v240 = vunpack.c.l.b16 %v208
    %v241 = vunpack.c.l.b16 %v209
    %v242 = vunpack.c.l.b16 %v210
    %v243 = vunpack.c.l.b16 %v211
    %v244 = vunpack.c.l.b16 %v212
    %v245 = vunpack.c.l.b16 %v213
    %v246 = vunpack.c.l.b16 %v214
    %v247 = vunpack.c.l.b16 %v215
    %v248 = vunpack.c.l.b16 %v216
    %v249 = vpack.c.b16 %v234, %v233
    %v250 = vpack.c.b16 %v236, %v235
    %v251 = vpack.c.b16 %v238, %v237
    %v252 = vpack.c.b16 %v240, %v239
    %v253 = vpack.c.b16 %v242, %v241
    %v254 = vpack.c.b16 %v244, %v243
    %v255 = vpack.c.b16 %v246, %v245
    %v256 = vpack.c.b16 %v248, %v247
    %265 = vmatprep.subr.bf16.mxu0 0
    %266 = vmatpush1.bf16.msra.mxu0 %v256
    %267 = vmatprep.subr.bf16.mxu0 0
    %268 = vmatpush1.bf16.msra.mxu0 %v255
    %269 = vmatprep.subr.bf16.mxu0 0
    %270 = vmatpush1.bf16.msra.mxu0 %v254
    %271 = vmatprep.subr.bf16.mxu0 0
    %272 = vmatpush1.bf16.msra.mxu0 %v253
    %273 = vmatprep.subr.bf16.mxu0 0
    %274 = vmatpush1.bf16.msra.mxu0 %v252
    %275 = vmatprep.subr.bf16.mxu0 0
    %276 = vmatpush1.bf16.msra.mxu0 %v251
    %277 = vmatprep.subr.bf16.mxu0 0
    %278 = vmatpush1.bf16.msra.mxu0 %v250
    %279 = vmatprep.subr.bf16.mxu0 0
    %280 = vmatpush1.bf16.msra.mxu0 %v249
    %281 = vmatprep.subr.bf16.mxu0 0
    %282 = vmatpush2.bf16.msra.mxu0 0
    %283 = vmatprep.subr.bf16.mxu0 0
    %284 = vmatpush2.bf16.msra.mxu0 0
    %285 = vmatprep.subr.bf16.mxu0 0
    %286 = vmatpush2.bf16.msra.mxu0 0
    %287 = vmatprep.subr.bf16.mxu0 0
    %288 = vmatpush2.bf16.msra.mxu0 0
    %289 = vmatprep.subr.bf16.mxu0 0
    %290 = vmatpush2.bf16.msra.mxu0 0
    %291 = vmatprep.subr.bf16.mxu0 0
    %292 = vmatpush2.bf16.msra.mxu0 0
    %293 = vmatprep.subr.bf16.mxu0 0
    %294 = vmatpush2.bf16.msra.mxu0 0
    %295 = vmatprep.subr.bf16.mxu0 0
    %296 = vmatpush2.bf16.msra.mxu0 0
    %297 = vmatprep.mubr.bf16.mxu0 0
    %298 = vmatmul.mubr.bf16.gmra.mxu0 %v199
    %v299 = vpop.f32.mrf.mxu0
    %v300 = vadd.f32 0.0, %v299
    %v301 = vpop.f32.mrf.mxu0
    %v302 = vpop.f32.mrf.mxu0
    %v303 = vadd.f32 0.0, %v302
    %v304 = vpop.f32.mrf.mxu0
    %305 = vdwg.mxu0
    %v306 = vpack.c.bf16 %v303, %v300
    %s307 = scalar_lea.vmem %s3, 1
    %v308 = vld [vmem:[%s307] sm:$0x1]
    %v310 = vlaneseq
    %v311 = vshrl.u32 %v310, 7
    %v312 = vsub.s32 0, %v311
    %v313 = vrot.slane %v308, %v312
    %315 = vmatprep.subr.bf16.mxu0 0
    %316 = vmatpush1.bf16.msra.mxu0 0
    %317 = vmatprep.subr.bf16.mxu0 0
    %318 = vmatpush1.bf16.msra.mxu0 0
    %319 = vmatprep.subr.bf16.mxu0 0
    %320 = vmatpush1.bf16.msra.mxu0 0
    %321 = vmatprep.subr.bf16.mxu0 0
    %322 = vmatpush1.bf16.msra.mxu0 0
    %323 = vmatprep.subr.bf16.mxu0 0
    %324 = vmatpush1.bf16.msra.mxu0 0
    %325 = vmatprep.subr.bf16.mxu0 0
    %326 = vmatpush1.bf16.msra.mxu0 0
    %327 = vmatprep.subr.bf16.mxu0 0
    %328 = vmatpush1.bf16.msra.mxu0 0
    %329 = vmatprep.subr.bf16.mxu0 0
    %330 = vmatpush1.bf16.msra.mxu0 %v306
    %331 = vmatprep.subr.bf16.mxu0 0
    %332 = vmatpush2.bf16.msra.mxu0 0
    %333 = vmatprep.subr.bf16.mxu0 0
    %334 = vmatpush2.bf16.msra.mxu0 0
    %335 = vmatprep.subr.bf16.mxu0 0
    %336 = vmatpush2.bf16.msra.mxu0 0
    %337 = vmatprep.subr.bf16.mxu0 0
    %338 = vmatpush2.bf16.msra.mxu0 0
    %339 = vmatprep.subr.bf16.mxu0 0
    %340 = vmatpush2.bf16.msra.mxu0 0
    %341 = vmatprep.subr.bf16.mxu0 0
    %342 = vmatpush2.bf16.msra.mxu0 0
    %343 = vmatprep.subr.bf16.mxu0 0
    %344 = vmatpush2.bf16.msra.mxu0 0
    %345 = vmatprep.subr.bf16.mxu0 0
    %346 = vmatpush2.bf16.msra.mxu0 0
    %347 = vmatprep.mubr.bf16.mxu0 0
    %348 = vmatmul.mubr.bf16.gmra.mxu0 %v154
    %v349 = vpop.f32.mrf.mxu0
    %v350 = vadd.f32 %v313, %v349
    %v351 = vpop.f32.mrf.mxu0
    %v352 = vpop.f32.mrf.mxu0
    %v353 = vadd.f32 %v313, %v352
    %v354 = vpop.f32.mrf.mxu0
    %355 = vdwg.mxu0
    %v356 = vmax.f32 %v350, 0.0
    %v357 = vmax.f32 %v353, 0.0
    %v358 = vpack.c.bf16 %v357, %v356
    %s359 = scalar_lea.vmem [#allocation2], 128
    %v360 = vld [vmem:[%s359] sm:$0xf]
    %v361 = vld [vmem:[%s359 + $0x4] sm:$0xf]
    %v362 = vld [vmem:[%s359 + $0x8] sm:$0xf]
    %v363 = vld [vmem:[%s359 + $0xc] sm:$0xf]
    %v364 = vld [vmem:[%s359 + $0x10] sm:$0xf]
    %v365 = vld [vmem:[%s359 + $0x14] sm:$0xf]
    %v366 = vld [vmem:[%s359 + $0x18] sm:$0xf]
    %v367 = vld [vmem:[%s359 + $0x1c] sm:$0xf]
    %v368 = vld [vmem:[%s359 + $0x20] sm:$0xf]
    %v369 = vld [vmem:[%s359 + $0x24] sm:$0xf]
    %v370 = vld [vmem:[%s359 + $0x28] sm:$0xf]
    %v371 = vld [vmem:[%s359 + $0x2c] sm:$0xf]
    %v372 = vld [vmem:[%s359 + $0x30] sm:$0xf]
    %v373 = vld [vmem:[%s359 + $0x34] sm:$0xf]
    %v374 = vld [vmem:[%s359 + $0x38] sm:$0xf]
    %v375 = vld [vmem:[%s359 + $0x3c] sm:$0xf]
    %s376 = scalar_lea.vmem %s3, 2
    %v377 = vld [vmem:[%s376] sm:$0x1]
    %v379 = vlaneseq
    %v380 = vshrl.u32 %v379, 7
    %v381 = vsub.s32 0, %v380
    %v382 = vrot.slane %v377, %v381
    %v400 = vunpack.c.l.b16 %v360
    %v401 = vunpack.c.l.b16 %v361
    %v402 = vunpack.c.l.b16 %v362
    %v403 = vunpack.c.l.b16 %v363
    %v404 = vunpack.c.l.b16 %v364
    %v405 = vunpack.c.l.b16 %v365
    %v406 = vunpack.c.l.b16 %v366
    %v407 = vunpack.c.l.b16 %v367
    %v408 = vunpack.c.l.b16 %v368
    %v409 = vunpack.c.l.b16 %v369
    %v410 = vunpack.c.l.b16 %v370
    %v411 = vunpack.c.l.b16 %v371
    %v412 = vunpack.c.l.b16 %v372
    %v413 = vunpack.c.l.b16 %v373
    %v414 = vunpack.c.l.b16 %v374
    %v415 = vunpack.c.l.b16 %v375
    %v416 = vpack.c.b16 %v401, %v400
    %v417 = vpack.c.b16 %v403, %v402
    %v418 = vpack.c.b16 %v405, %v404
    %v419 = vpack.c.b16 %v407, %v406
    %v420 = vpack.c.b16 %v409, %v408
    %v421 = vpack.c.b16 %v411, %v410
    %v422 = vpack.c.b16 %v413, %v412
    %v423 = vpack.c.b16 %v415, %v414
    %432 = vmatprep.subr.bf16.mxu0 0
    %433 = vmatpush1.bf16.msra.mxu0 %v423
    %434 = vmatprep.subr.bf16.mxu0 0
    %435 = vmatpush1.bf16.msra.mxu0 %v422
    %436 = vmatprep.subr.bf16.mxu0 0
    %437 = vmatpush1.bf16.msra.mxu0 %v421
    %438 = vmatprep.subr.bf16.mxu0 0
    %439 = vmatpush1.bf16.msra.mxu0 %v420
    %440 = vmatprep.subr.bf16.mxu0 0
    %441 = vmatpush1.bf16.msra.mxu0 %v419
    %442 = vmatprep.subr.bf16.mxu0 0
    %443 = vmatpush1.bf16.msra.mxu0 %v418
    %444 = vmatprep.subr.bf16.mxu0 0
    %445 = vmatpush1.bf16.msra.mxu0 %v417
    %446 = vmatprep.subr.bf16.mxu0 0
    %447 = vmatpush1.bf16.msra.mxu0 %v416
    %448 = vmatprep.subr.bf16.mxu0 0
    %449 = vmatpush2.bf16.msra.mxu0 0
    %450 = vmatprep.subr.bf16.mxu0 0
    %451 = vmatpush2.bf16.msra.mxu0 0
    %452 = vmatprep.subr.bf16.mxu0 0
    %453 = vmatpush2.bf16.msra.mxu0 0
    %454 = vmatprep.subr.bf16.mxu0 0
    %455 = vmatpush2.bf16.msra.mxu0 0
    %456 = vmatprep.subr.bf16.mxu0 0
    %457 = vmatpush2.bf16.msra.mxu0 0
    %458 = vmatprep.subr.bf16.mxu0 0
    %459 = vmatpush2.bf16.msra.mxu0 0
    %460 = vmatprep.subr.bf16.mxu0 0
    %461 = vmatpush2.bf16.msra.mxu0 0
    %462 = vmatprep.subr.bf16.mxu0 0
    %463 = vmatpush2.bf16.msra.mxu0 0
    %464 = vmatprep.mubr.bf16.mxu0 0
    %465 = vmatmul.mubr.bf16.gmra.mxu0 %v358
    %v466 = vpop.f32.mrf.mxu0
    %v467 = vadd.f32 %v382, %v466
    %v468 = vpop.f32.mrf.mxu0
    %v469 = vpop.f32.mrf.mxu0
    %v470 = vadd.f32 %v382, %v469
    %v471 = vpop.f32.mrf.mxu0
    %472 = vdwg.mxu0
    %v473 = vmax.f32 %v467, 0.0
    %v474 = vmax.f32 %v470, 0.0
    %v475 = vpack.c.bf16 %v474, %v473
    %s476 = scalar_lea.vmem [#allocation2], 192
    %v477 = vld [vmem:[%s476] sm:$0xf]
    %v478 = vld [vmem:[%s476 + $0x4] sm:$0xf]
    %v479 = vld [vmem:[%s476 + $0x8] sm:$0xf]
    %v480 = vld [vmem:[%s476 + $0xc] sm:$0xf]
    %v481 = vld [vmem:[%s476 + $0x10] sm:$0xf]
    %v482 = vld [vmem:[%s476 + $0x14] sm:$0xf]
    %v483 = vld [vmem:[%s476 + $0x18] sm:$0xf]
    %v484 = vld [vmem:[%s476 + $0x1c] sm:$0xf]
    %v485 = vld [vmem:[%s476 + $0x20] sm:$0xf]
    %v486 = vld [vmem:[%s476 + $0x24] sm:$0xf]
    %v487 = vld [vmem:[%s476 + $0x28] sm:$0xf]
    %v488 = vld [vmem:[%s476 + $0x2c] sm:$0xf]
    %v489 = vld [vmem:[%s476 + $0x30] sm:$0xf]
    %v490 = vld [vmem:[%s476 + $0x34] sm:$0xf]
    %v491 = vld [vmem:[%s476 + $0x38] sm:$0xf]
    %v492 = vld [vmem:[%s476 + $0x3c] sm:$0xf]
    %s493 = scalar_lea.vmem %s3, 3
    %v494 = vld [vmem:[%s493] sm:$0x1]
    %v496 = vlaneseq
    %v497 = vshrl.u32 %v496, 7
    %v498 = vsub.s32 0, %v497
    %v499 = vrot.slane %v494, %v498
    %v517 = vunpack.c.l.b16 %v477
    %v518 = vunpack.c.l.b16 %v478
    %v519 = vunpack.c.l.b16 %v479
    %v520 = vunpack.c.l.b16 %v480
    %v521 = vunpack.c.l.b16 %v481
    %v522 = vunpack.c.l.b16 %v482
    %v523 = vunpack.c.l.b16 %v483
    %v524 = vunpack.c.l.b16 %v484
    %v525 = vunpack.c.l.b16 %v485
    %v526 = vunpack.c.l.b16 %v486
    %v527 = vunpack.c.l.b16 %v487
    %v528 = vunpack.c.l.b16 %v488
    %v529 = vunpack.c.l.b16 %v489
    %v530 = vunpack.c.l.b16 %v490
    %v531 = vunpack.c.l.b16 %v491
    %v532 = vunpack.c.l.b16 %v492
    %v533 = vpack.c.b16 %v518, %v517
    %v534 = vpack.c.b16 %v520, %v519
    %v535 = vpack.c.b16 %v522, %v521
    %v536 = vpack.c.b16 %v524, %v523
    %v537 = vpack.c.b16 %v526, %v525
    %v538 = vpack.c.b16 %v528, %v527
    %v539 = vpack.c.b16 %v530, %v529
    %v540 = vpack.c.b16 %v532, %v531
    %549 = vmatprep.subr.bf16.mxu0 0
    %550 = vmatpush1.bf16.msra.mxu0 %v540
    %551 = vmatprep.subr.bf16.mxu0 0
    %552 = vmatpush1.bf16.msra.mxu0 %v539
    %553 = vmatprep.subr.bf16.mxu0 0
    %554 = vmatpush1.bf16.msra.mxu0 %v538
    %555 = vmatprep.subr.bf16.mxu0 0
    %556 = vmatpush1.bf16.msra.mxu0 %v537
    %557 = vmatprep.subr.bf16.mxu0 0
    %558 = vmatpush1.bf16.msra.mxu0 %v536
    %559 = vmatprep.subr.bf16.mxu0 0
    %560 = vmatpush1.bf16.msra.mxu0 %v535
    %561 = vmatprep.subr.bf16.mxu0 0
    %562 = vmatpush1.bf16.msra.mxu0 %v534
    %563 = vmatprep.subr.bf16.mxu0 0
    %564 = vmatpush1.bf16.msra.mxu0 %v533
    %565 = vmatprep.subr.bf16.mxu0 0
    %566 = vmatpush2.bf16.msra.mxu0 0
    %567 = vmatprep.subr.bf16.mxu0 0
    %568 = vmatpush2.bf16.msra.mxu0 0
    %569 = vmatprep.subr.bf16.mxu0 0
    %570 = vmatpush2.bf16.msra.mxu0 0
    %571 = vmatprep.subr.bf16.mxu0 0
    %572 = vmatpush2.bf16.msra.mxu0 0
    %573 = vmatprep.subr.bf16.mxu0 0
    %574 = vmatpush2.bf16.msra.mxu0 0
    %575 = vmatprep.subr.bf16.mxu0 0
    %576 = vmatpush2.bf16.msra.mxu0 0
    %577 = vmatprep.subr.bf16.mxu0 0
    %578 = vmatpush2.bf16.msra.mxu0 0
    %579 = vmatprep.subr.bf16.mxu0 0
    %580 = vmatpush2.bf16.msra.mxu0 0
    %581 = vmatprep.mubr.bf16.mxu0 0
    %582 = vmatmul.mubr.bf16.gmra.mxu0 %v475
    %v583 = vpop.f32.mrf.mxu0
    %v584 = vadd.f32 %v499, %v583
    %v585 = vpop.f32.mrf.mxu0
    %v586 = vpop.f32.mrf.mxu0
    %v587 = vadd.f32 %v499, %v586
    %v588 = vpop.f32.mrf.mxu0
    %589 = vdwg.mxu0
    %v590 = vmax.f32 %v584, 0.0
    %v591 = vmax.f32 %v587, 0.0
    %v592 = vpack.c.bf16 %v591, %v590
    %s593 = scalar_lea.vmem [#allocation2], 256
    %v594 = vld [vmem:[%s593] sm:$0xf]
    %v595 = vld [vmem:[%s593 + $0x4] sm:$0xf]
    %v596 = vld [vmem:[%s593 + $0x8] sm:$0xf]
    %v597 = vld [vmem:[%s593 + $0xc] sm:$0xf]
    %v598 = vld [vmem:[%s593 + $0x10] sm:$0xf]
    %v599 = vld [vmem:[%s593 + $0x14] sm:$0xf]
    %v600 = vld [vmem:[%s593 + $0x18] sm:$0xf]
    %v601 = vld [vmem:[%s593 + $0x1c] sm:$0xf]
    %v602 = vld [vmem:[%s593 + $0x20] sm:$0xf]
    %v603 = vld [vmem:[%s593 + $0x24] sm:$0xf]
    %v604 = vld [vmem:[%s593 + $0x28] sm:$0xf]
    %v605 = vld [vmem:[%s593 + $0x2c] sm:$0xf]
    %v606 = vld [vmem:[%s593 + $0x30] sm:$0xf]
    %v607 = vld [vmem:[%s593 + $0x34] sm:$0xf]
    %v608 = vld [vmem:[%s593 + $0x38] sm:$0xf]
    %v609 = vld [vmem:[%s593 + $0x3c] sm:$0xf]
    %s610 = scalar_lea.vmem %s3, 4
    %v611 = vld [vmem:[%s610] sm:$0x1]
    %v613 = vlaneseq
    %v614 = vshrl.u32 %v613, 7
    %v615 = vsub.s32 0, %v614
    %v616 = vrot.slane %v611, %v615
    %v634 = vunpack.c.l.b16 %v594
    %v635 = vunpack.c.l.b16 %v595
    %v636 = vunpack.c.l.b16 %v596
    %v637 = vunpack.c.l.b16 %v597
    %v638 = vunpack.c.l.b16 %v598
    %v639 = vunpack.c.l.b16 %v599
    %v640 = vunpack.c.l.b16 %v600
    %v641 = vunpack.c.l.b16 %v601
    %v642 = vunpack.c.l.b16 %v602
    %v643 = vunpack.c.l.b16 %v603
    %v644 = vunpack.c.l.b16 %v604
    %v645 = vunpack.c.l.b16 %v605
    %v646 = vunpack.c.l.b16 %v606
    %v647 = vunpack.c.l.b16 %v607
    %v648 = vunpack.c.l.b16 %v608
    %v649 = vunpack.c.l.b16 %v609
    %v650 = vpack.c.b16 %v635, %v634
    %v651 = vpack.c.b16 %v637, %v636
    %v652 = vpack.c.b16 %v639, %v638
    %v653 = vpack.c.b16 %v641, %v640
    %v654 = vpack.c.b16 %v643, %v642
    %v655 = vpack.c.b16 %v645, %v644
    %v656 = vpack.c.b16 %v647, %v646
    %v657 = vpack.c.b16 %v649, %v648
    %666 = vmatprep.subr.bf16.mxu0 0
    %667 = vmatpush1.bf16.msra.mxu0 %v657
    %668 = vmatprep.subr.bf16.mxu0 0
    %669 = vmatpush1.bf16.msra.mxu0 %v656
    %670 = vmatprep.subr.bf16.mxu0 0
    %671 = vmatpush1.bf16.msra.mxu0 %v655
    %672 = vmatprep.subr.bf16.mxu0 0
    %673 = vmatpush1.bf16.msra.mxu0 %v654
    %674 = vmatprep.subr.bf16.mxu0 0
    %675 = vmatpush1.bf16.msra.mxu0 %v653
    %676 = vmatprep.subr.bf16.mxu0 0
    %677 = vmatpush1.bf16.msra.mxu0 %v652
    %678 = vmatprep.subr.bf16.mxu0 0
    %679 = vmatpush1.bf16.msra.mxu0 %v651
    %680 = vmatprep.subr.bf16.mxu0 0
    %681 = vmatpush1.bf16.msra.mxu0 %v650
    %682 = vmatprep.subr.bf16.mxu0 0
    %683 = vmatpush2.bf16.msra.mxu0 0
    %684 = vmatprep.subr.bf16.mxu0 0
    %685 = vmatpush2.bf16.msra.mxu0 0
    %686 = vmatprep.subr.bf16.mxu0 0
    %687 = vmatpush2.bf16.msra.mxu0 0
    %688 = vmatprep.subr.bf16.mxu0 0
    %689 = vmatpush2.bf16.msra.mxu0 0
    %690 = vmatprep.subr.bf16.mxu0 0
    %691 = vmatpush2.bf16.msra.mxu0 0
    %692 = vmatprep.subr.bf16.mxu0 0
    %693 = vmatpush2.bf16.msra.mxu0 0
    %694 = vmatprep.subr.bf16.mxu0 0
    %695 = vmatpush2.bf16.msra.mxu0 0
    %696 = vmatprep.subr.bf16.mxu0 0
    %697 = vmatpush2.bf16.msra.mxu0 0
    %698 = vmatprep.mubr.bf16.mxu0 0
    %699 = vmatmul.mubr.bf16.gmra.mxu0 %v592
    %v700 = vpop.f32.mrf.mxu0
    %v701 = vadd.f32 %v616, %v700
    %v702 = vpop.f32.mrf.mxu0
    %v703 = vpop.f32.mrf.mxu0
    %v704 = vadd.f32 %v616, %v703
    %v705 = vpop.f32.mrf.mxu0
    %706 = vdwg.mxu0
    %v707 = vlaneseq
    %v708 = vand.u32 %v707, 127
    %vm709 = vcmp.lt.s32.totalorder %v708, 8
    %v710 = vsel %vm709, %v701, -1e+30
    %v711 = vsel %vm709, %v704, -1e+30
    %712 = vmax.xlane.f32.xlu0 %v710
    %v713 = vpop.xlane.xlu0 %712
    %714 = vmax.xlane.f32.xlu0 %v711
    %v715 = vpop.xlane.xlu0 %714
    %v716 = vsub.f32 %v710, %v713
    %v717 = vsub.f32 %v711, %v715
    %v718 = vmul.f32 %v716, 1.442695
    %v719 = vpow.pop %v718
    %v720 = vmul.f32 %v717, 1.442695
    %v721 = vpow.pop %v720
    %v722 = vsel %vm709, %v719, 0.0
    %v723 = vsel %vm709, %v721, 0.0
    %724 = vadd.xlane.f32.xlu0 %v722
    %v725 = vpop.xlane.xlu0 %724
    %726 = vadd.xlane.f32.xlu0 %v723
    %v727 = vpop.xlane.xlu0 %726
    %v728 = vrcp.pop %v725
    %v729 = vmul.f32 %v722, %v728
    %v730 = vrcp.pop %v727
    %v731 = vmul.f32 %v723, %v730
    %732 = vst [vmem:[#allocation5] sm:$0xff] %v729
    %733 = vst [vmem:[#allocation5 + $0x8] sm:$0xff] %v731
    // Predicated region
    $region22: #{gcn_fused_forward.1} parent=1 // pred_check
      _
    $region23: #{gcn_fused_forward.1} parent=1 // pred_check_branch
      %735 = sbr.rel (0) target = $region25
    $region24: #{gcn_fused_forward.1} parent=1 // pred_region
      %s737 = ssub.s32 256, 256
      %738 = vsyncadd [#allocation4], %s737
      %s739 = sshll.u32 [#allocation5], 4
      %s740 = int_to_ptr.vmem [resolvable:$true] %s739
      %745 = dma.vmem_to_hbm [thread:$0]  %s740, 256, %s4, [#allocation4], 128, 128, 8
    $region25: #{gcn_fused_forward.1} parent=1 // pred_fallthru
      _
    // Predicated region
    $region26: #{gcn_fused_forward.1} parent=1 // pred_check
      _
    $region27: #{gcn_fused_forward.1} parent=1 // pred_check_branch
      %747 = sbr.rel (0) target = $region29
    $region28: #{gcn_fused_forward.1} parent=1 // pred_region
      %748 = dma.done [#allocation4], 256
    $region29: #{gcn_fused_forward.1} parent=1 // pred_fallthru
      _
    %749 = vsyncpa [#allocation3], 1
    %750 = vsyncpa [#allocation4], 1

</llo_original>
